<compile_context>
chip_gen: v6e
topology: v6e:2x2x1
jax: 0.10.0
libtpu: 0.0.40
codegen_flags: <defaults>
</compile_context>

<pallas_src>
import jax
import jax.numpy as jnp
from jax.experimental import pallas as pl
from jax.experimental.pallas import tpu as pltpu

D_IN = 784      # input features
N_CLS = 10      # real classes
N_PAD = 128     # lane-dense padded class dim for compute


def _round_up(n, m):
    return ((n + m - 1) // m) * m


def _linear_elu_logsoftmax_kernel(x_ref, w_ref, b_ref, o_ref):
    # x_ref: (tb, 784)  w_ref: (784, 128)  b_ref: (1, 128)  o_ref: (tb, 10)
    y = jnp.dot(x_ref[...], w_ref[...],
                preferred_element_type=jnp.float32) + b_ref[...]

    # ELU(alpha=1) on the real columns; -inf on the lane padding so it drops out
    # of the log-softmax normalizer. Single fused select chain; the exp argument
    # is clamped so the un-taken branch never overflows.
    col = jax.lax.broadcasted_iota(jnp.int32, y.shape, 1)
    y = jnp.where(col < N_CLS,
                  jnp.where(y > 0, y, jnp.exp(jnp.minimum(y, 0.0)) - 1.0),
                  -jnp.inf)

    # Numerically-stable log_softmax along the class axis (128-lane reductions).
    m = jnp.max(y, axis=1, keepdims=True)
    s = y - m
    lse = jnp.log(jnp.sum(jnp.exp(s), axis=1, keepdims=True))

    # Narrow store: only the 10 real class columns reach HBM.
    o_ref[...] = s[:, :N_CLS] - lse


def prepare_params(weight, bias, *, use_bf16=False):
    """Pad/transpose nn.Linear params once (hoist out of the per-call path).

    weight: (10, 784) PyTorch layout; bias: (10,).
    Returns (W^T padded to (784, 128), bias padded to (1, 128) f32).
    """
    w_dtype = jnp.bfloat16 if use_bf16 else jnp.float32
    w_t = jnp.zeros((D_IN, N_PAD), w_dtype).at[:, :N_CLS].set(
        weight.T.astype(w_dtype))
    b_p = jnp.zeros((1, N_PAD), jnp.float32).at[:, :N_CLS].set(
        bias.astype(jnp.float32))
    return w_t, b_p


def linear_elu(x, weight, bias, *, tile_b=1024, use_bf16=False, prepared=None):
    """Forward pass of the PyTorch `linear_elu` module.

    x:      any shape with 784 elements per row after flatten (e.g. (B,1,28,28)).
    weight: (10, 784)  -- PyTorch nn.Linear layout (out_features, in_features).
    bias:   (10,)
    use_bf16: cast x / W^T to bf16 (halves the dominant HBM read; ~1e-3 rel err).
    prepared: optional precomputed prepare_params(...) output.
    Returns (B, 10) float32 log-probabilities.
    """
    x_dtype = jnp.bfloat16 if use_bf16 else jnp.float32
    x2d = x.reshape(-1, D_IN).astype(x_dtype)
    B = x2d.shape[0]

    if prepared is None:
        prepared = prepare_params(weight, bias, use_bf16=use_bf16)
    w_t, b_p = prepared

    # Batch tile: multiple of 8 (16 for bf16 sublane packing); sized so the grid
    # has at least 2 steps when the batch allows it (keeps both v7x TCs busy via
    # the "parallel" axis). No wrapper-side padding: Pallas masks the ragged
    # final block's writeback (its garbage rows are computed-then-discarded).
    align = 16 if use_bf16 else 8
    half = _round_up(max(1, -(-B // 2)), align)          # ceil(B/2), aligned
    tb = max(align, min(_round_up(tile_b, align), half))
    grid = (pl.cdiv(B, tb),)

    out = pl.pallas_call(
        _linear_elu_logsoftmax_kernel,
        out_shape=jax.ShapeDtypeStruct((B, N_CLS), jnp.float32),
        grid=grid,
        in_specs=[
            pl.BlockSpec((tb, D_IN), lambda i: (i, 0)),       # x: batch-tiled
            pl.BlockSpec((D_IN, N_PAD), lambda i: (0, 0)),    # W^T: resident
            pl.BlockSpec((1, N_PAD), lambda i: (0, 0)),       # bias: resident
        ],
        out_specs=pl.BlockSpec((tb, N_CLS), lambda i: (i, 0)),
        compiler_params=pltpu.CompilerParams(
            dimension_semantics=("parallel",),
            vmem_limit_bytes=64 << 20,
        ),
    )(x2d, w_t, b_p)

    return out


def _reference(x, weight, bias):
    y = x.reshape(-1, D_IN).astype(jnp.float32) @ weight.T.astype(jnp.float32)
    y = y + bias.astype(jnp.float32)
    y = jnp.where(y > 0, y, jnp.exp(jnp.minimum(y, 0.0)) - 1.0)   # ELU(alpha=1)
    return jax.nn.log_softmax(y, axis=1)


if __name__ == "__main__":
    key = jax.random.PRNGKey(0)
    kx, kw, kb, kx2 = jax.random.split(key, 4)

    # nn.Linear-style uniform(-1/sqrt(784), 1/sqrt(784)) init, PyTorch layout.
    bound = 1.0 / jnp.sqrt(784.0)
    weight = jax.random.uniform(kw, (N_CLS, D_IN), minval=-bound, maxval=bound,
                                dtype=jnp.float32)
    bias = jax.random.uniform(kb, (N_CLS,), minval=-bound, maxval=bound,
                              dtype=jnp.float32)

    # Small MNIST-like batch: (B, 1, 28, 28) -> (B, 784). Single grid step.
    B = 8
    x = jax.random.normal(kx, (B, 1, 28, 28), dtype=jnp.float32)
    out = jax.block_until_ready(linear_elu(x, weight, bias))
    ref = _reference(x, weight, bias)
    assert out.shape == (B, N_CLS)
    assert jnp.allclose(out, ref, atol=1e-4, rtol=1e-4), "mismatch vs reference (B=8)"

    # Non-multiple batch + small tile: multi-step grid with a ragged final block
    # (exercises the no-padding path and the narrow (tb, 10) output blocks).
    B2 = 300
    x2 = jax.random.normal(kx2, (B2, 784), dtype=jnp.float32)
    out2 = jax.block_until_ready(linear_elu(x2, weight, bias, tile_b=128))
    ref2 = _reference(x2, weight, bias)
    assert out2.shape == (B2, N_CLS)
    assert jnp.allclose(out2, ref2, atol=1e-4, rtol=1e-4), "mismatch vs reference (B=300)"

    # Optional bf16-x fast path (halved x read traffic); looser tolerance by design.
    out3 = jax.block_until_ready(linear_elu(x2, weight, bias, tile_b=128,
                                            use_bf16=True))
    assert out3.shape == (B2, N_CLS)
    assert bool(jnp.all(jnp.isfinite(out3)))
    assert jnp.allclose(out3, ref2, atol=5e-2, rtol=5e-2), "bf16 path too far off"

    print("KERNEL_OK")
</pallas_src>

<mosaic_0001>
module attributes {stable_mosaic.version = 11 : i64} {
  func.func @_linear_elu_logsoftmax_kernel(%arg0: i32, %arg1: memref<8x784xf32, #tpu.memory_space<vmem>>, %arg2: memref<784x128xf32, #tpu.memory_space<vmem>>, %arg3: memref<1x128xf32, #tpu.memory_space<vmem>>, %arg4: memref<8x10xf32, #tpu.memory_space<vmem>>) attributes {dimension_semantics = [#tpu.dimension_semantics<parallel>], iteration_bounds = array<i64: 1>, scalar_prefetch = 0 : i64, scratch_operands = 0 : i64, tpu.core_type = #tpu.core_type<tc>, window_params = [{transform_indices = @transform_0, window_bounds = array<i64: 8, 784>}, {pipeline_mode = #tpu.pipeline_mode<synchronous>, transform_indices = @transform_1, window_bounds = array<i64: 784, 128>}, {pipeline_mode = #tpu.pipeline_mode<synchronous>, transform_indices = @transform_2, window_bounds = array<i64: 1, 128>}, {transform_indices = @transform_3, window_bounds = array<i64: 8, 10>}]} {
    %c0 = arith.constant 0 : index
    %c0_0 = arith.constant 0 : index
    %0 = vector.load %arg1[%c0, %c0_0] : memref<8x784xf32, #tpu.memory_space<vmem>>, vector<8x784xf32>
    %c0_1 = arith.constant 0 : index
    %c0_2 = arith.constant 0 : index
    %1 = vector.load %arg2[%c0_1, %c0_2] : memref<784x128xf32, #tpu.memory_space<vmem>>, vector<784x128xf32>
    %cst = arith.constant dense<0.000000e+00> : vector<8x128xf32>
    %2 = tpu.matmul %0, %1, %cst {dimension_numbers = #tpu.dot_dimension_numbers<[1], [0], [0], [1], [0, 0, 1, 1], [], []>} : vector<8x784xf32>, vector<784x128xf32>, vector<8x128xf32> -> vector<8x128xf32>
    %c0_3 = arith.constant 0 : index
    %c0_4 = arith.constant 0 : index
    %3 = vector.load %arg3[%c0_3, %c0_4] : memref<1x128xf32, #tpu.memory_space<vmem>>, vector<1x128xf32>
    %4 = vector.broadcast %3 : vector<1x128xf32> to vector<8x128xf32>
    %5 = arith.addf %2, %4 : vector<8x128xf32>
    %6 = tpu.iota {dimensions = array<i32: 1>} : vector<8x128xi32>
    %c10_i32 = arith.constant 10 : i32
    %7 = vector.broadcast %c10_i32 : i32 to vector<8x128xi32>
    %8 = arith.cmpi slt, %6, %7 : vector<8x128xi32>
    %cst_5 = arith.constant 0.000000e+00 : f32
    %9 = vector.broadcast %cst_5 : f32 to vector<8x128xf32>
    %10 = arith.cmpf ogt, %5, %9 : vector<8x128xf32>
    %cst_6 = arith.constant 0.000000e+00 : f32
    %11 = vector.broadcast %cst_6 : f32 to vector<8x128xf32>
    %12 = arith.minimumf %5, %11 : vector<8x128xf32>
    %13 = math.exp %12 : vector<8x128xf32>
    %cst_7 = arith.constant 1.000000e+00 : f32
    %14 = vector.broadcast %cst_7 : f32 to vector<8x128xf32>
    %15 = arith.subf %13, %14 : vector<8x128xf32>
    %16 = arith.select %10, %5, %15 : vector<8x128xi1>, vector<8x128xf32>
    %cst_8 = arith.constant 0xFF800000 : f32
    %17 = vector.broadcast %cst_8 : f32 to vector<8x128xf32>
    %18 = arith.select %8, %16, %17 : vector<8x128xi1>, vector<8x128xf32>
    %cst_9 = arith.constant dense<0xFF800000> : vector<8xf32>
    %19 = vector.multi_reduction <maximumf>, %18, %cst_9 [1] : vector<8x128xf32> to vector<8xf32>
    %20 = vector.shape_cast %19 : vector<8xf32> to vector<8x1xf32>
    %21 = vector.broadcast %20 : vector<8x1xf32> to vector<8x128xf32>
    %22 = arith.subf %18, %21 : vector<8x128xf32>
    %23 = math.exp %22 : vector<8x128xf32>
    %cst_10 = arith.constant dense<0.000000e+00> : vector<8xf32>
    %24 = vector.multi_reduction <add>, %23, %cst_10 [1] : vector<8x128xf32> to vector<8xf32>
    %25 = vector.shape_cast %24 : vector<8xf32> to vector<8x1xf32>
    %26 = math.log %25 : vector<8x1xf32>
    %27 = vector.extract_strided_slice %22 {offsets = [0, 0], sizes = [8, 10], strides = [1, 1]} : vector<8x128xf32> to vector<8x10xf32>
    %28 = vector.broadcast %26 : vector<8x1xf32> to vector<8x10xf32>
    %29 = arith.subf %27, %28 : vector<8x10xf32>
    %c0_11 = arith.constant 0 : index
    %c0_12 = arith.constant 0 : index
    %30 = vector.load %arg4[%c0_11, %c0_12] : memref<8x10xf32, #tpu.memory_space<vmem>>, vector<8x10xf32>
    tpu.vector_store %arg4[%c0_11, %c0_12], %29 {strides = array<i32>} : memref<8x10xf32, #tpu.memory_space<vmem>>, vector<8x10xf32>,
    return
  }
  func.func @transform_0(%arg0: i32) -> (i32, i32) {
    %c0_i32 = arith.constant 0 : i32
    %c0_i32_0 = arith.constant 0 : i32
    return %arg0, %c0_i32 : i32, i32
  }
  func.func @transform_1(%arg0: i32) -> (i32, i32) {
    %c0_i32 = arith.constant 0 : i32
    %c0_i32_0 = arith.constant 0 : i32
    %c0_i32_1 = arith.constant 0 : i32
    return %c0_i32, %c0_i32_0 : i32, i32
  }
  func.func @transform_2(%arg0: i32) -> (i32, i32) {
    %c0_i32 = arith.constant 0 : i32
    %c0_i32_0 = arith.constant 0 : i32
    %c0_i32_1 = arith.constant 0 : i32
    return %c0_i32, %c0_i32_0 : i32, i32
  }
  func.func @transform_3(%arg0: i32) -> (i32, i32) {
    %c0_i32 = arith.constant 0 : i32
    %c0_i32_0 = arith.constant 0 : i32
    return %arg0, %c0_i32 : i32, i32
  }
}

</mosaic_0001>

<llo_original>
// kernel: tpu_custom_call.1
$region0: #{tpu_custom_call.1}
  #allocation0 [shape = 'u32[]', space=smem, size = 0x4, offset = 0x4, fixed_abs, tag = 'smem constant byte address 0x4 - core index']
  #allocation1 [shape = 'u32[144,128]{1,0:T(1,128)}', space=vmem, size = 0x12000, scoped, tag = 'internal scratch']
  %s0 = inlined_call_operand.hbm [shape: f32[8,784], index: 0, kind: input, shape index: {}]
  %s1 = inlined_call_operand.hbm [shape: f32[784,128], index: 1, kind: input, shape index: {}]
  %s2 = inlined_call_operand.vmem [shape: f32[1,128], index: 2, kind: input, shape index: {}]
  %s3 = inlined_call_operand.hbm [shape: f32[8,10], index: 3, kind: output, shape index: {}]
  %s4 = sld [smem:[#allocation0]]
  $region30: #{tpu_custom_call.1} parent=0
    _
  %s6 = ssub.s32 1, %s4
  %s7 = scalar_select 0, %s6, %s4
  $region1: #{tpu_custom_call.1} parent=0
    #allocation2 [shape = 'u8[28672]{0}', space=vmem, size = 0x7000, scoped, tag = 'input window, operand 0, single buffered']
    #allocation3 [shape = 's32[1]{0}', space=sflag, size = 0x4, scoped, tag = 'scoped memory for tpu_custom_call.1']
    #allocation4 [shape = 's32[1]{0}', space=sflag, size = 0x4, scoped, tag = 'scoped memory for tpu_custom_call.1']
    #allocation5 [shape = 'u8[401408]{0}', space=vmem, size = 0x62000, scoped, tag = 'input window, operand 1, single buffered']
    #allocation6 [shape = 's32[1]{0}', space=sflag, size = 0x4, scoped, tag = 'scoped memory for tpu_custom_call.1']
    #allocation7 [shape = 'u8[4096]{0}', space=vmem, size = 0x1000, scoped, tag = 'output window, operand 0, single buffered']
    %8 = vsyncpa [#allocation3], 0
    %9 = vsyncpa [#allocation6], 0
    %10 = vsyncpa [#allocation4], 0
    // Predicated region
    $region2: #{tpu_custom_call.1} parent=1 // pred_check
      _
    $region3: #{tpu_custom_call.1} parent=1 // pred_check_branch
      %12 = sbr.rel (0) target = $region5
    $region4: #{tpu_custom_call.1} parent=1 // pred_region
      %s14 = ssub.s32 896, 896
      %15 = vsyncadd [#allocation3], %s14
      %s17 = sshll.u32 [#allocation2], 4
      %s18 = int_to_ptr.vmem [resolvable:$true] %s17
      %20 = dma.hbm_to_vmem [thread:$0]  %s0, 896, %s18, [#allocation3]
    $region5: #{tpu_custom_call.1} parent=1 // pred_fallthru
      _
    // Predicated region
    $region6: #{tpu_custom_call.1} parent=1 // pred_check
      _
    $region7: #{tpu_custom_call.1} parent=1 // pred_check_branch
      %22 = sbr.rel (0) target = $region9
    $region8: #{tpu_custom_call.1} parent=1 // pred_region
      %s24 = ssub.s32 12544, 12544
      %25 = vsyncadd [#allocation6], %s24
      %s26 = sshll.u32 [#allocation5], 4
      %s27 = int_to_ptr.vmem [resolvable:$true] %s26
      %32 = dma.hbm_to_vmem [thread:$0]  %s1, 12544, %s27, [#allocation6], 128, 128, 8
    $region9: #{tpu_custom_call.1} parent=1 // pred_fallthru
      _
    // Predicated region
    $region10: #{tpu_custom_call.1} parent=1 // pred_check
      _
    $region11: #{tpu_custom_call.1} parent=1 // pred_check_branch
      %34 = sbr.rel (0) target = $region13
    $region12: #{tpu_custom_call.1} parent=1 // pred_region
      _
    $region13: #{tpu_custom_call.1} parent=1 // pred_fallthru
      _
    // Predicated region
    $region14: #{tpu_custom_call.1} parent=1 // pred_check
      _
    $region15: #{tpu_custom_call.1} parent=1 // pred_check_branch
      %36 = sbr.rel (0) target = $region17
    $region16: #{tpu_custom_call.1} parent=1 // pred_region
      %37 = dma.done [#allocation3], 896
    $region17: #{tpu_custom_call.1} parent=1 // pred_fallthru
      _
    // Predicated region
    $region18: #{tpu_custom_call.1} parent=1 // pred_check
      _
    $region19: #{tpu_custom_call.1} parent=1 // pred_check_branch
      %39 = sbr.rel (0) target = $region21
    $region20: #{tpu_custom_call.1} parent=1 // pred_region
      %40 = dma.done [#allocation6], 12544
    $region21: #{tpu_custom_call.1} parent=1 // pred_fallthru
      _
    %v41 = vld [vmem:[#allocation2] sm:$0xff]
    %v42 = vld [vmem:[#allocation2 + $0x8] sm:$0xff]
    %v43 = vld [vmem:[#allocation2 + $0x10] sm:$0xff]
    %v44 = vld [vmem:[#allocation2 + $0x18] sm:$0xff]
    %v45 = vld [vmem:[#allocation2 + $0x20] sm:$0xff]
    %v46 = vld [vmem:[#allocation2 + $0x28] sm:$0xff]
    %v47 = vld [vmem:[#allocation2 + $0x30] sm:$0xff]
    %v48 = vld [vmem:[#allocation5] sm:$0xff]
    %v49 = vld [vmem:[#allocation5 + $0x8] sm:$0xff]
    %v50 = vld [vmem:[#allocation5 + $0x10] sm:$0xff]
    %v51 = vld [vmem:[#allocation5 + $0x18] sm:$0xff]
    %v52 = vld [vmem:[#allocation5 + $0x20] sm:$0xff]
    %v53 = vld [vmem:[#allocation5 + $0x28] sm:$0xff]
    %v54 = vld [vmem:[#allocation5 + $0x30] sm:$0xff]
    %v55 = vld [vmem:[#allocation5 + $0x38] sm:$0xff]
    %v56 = vld [vmem:[#allocation5 + $0x40] sm:$0xff]
    %v57 = vld [vmem:[#allocation5 + $0x48] sm:$0xff]
    %v58 = vld [vmem:[#allocation5 + $0x50] sm:$0xff]
    %v59 = vld [vmem:[#allocation5 + $0x58] sm:$0xff]
    %v60 = vld [vmem:[#allocation5 + $0x60] sm:$0xff]
    %v61 = vld [vmem:[#allocation5 + $0x68] sm:$0xff]
    %v62 = vld [vmem:[#allocation5 + $0x70] sm:$0xff]
    %v63 = vld [vmem:[#allocation5 + $0x78] sm:$0xff]
    %v64 = vld [vmem:[#allocation5 + $0x80] sm:$0xff]
    %v65 = vld [vmem:[#allocation5 + $0x88] sm:$0xff]
    %v66 = vld [vmem:[#allocation5 + $0x90] sm:$0xff]
    %v67 = vld [vmem:[#allocation5 + $0x98] sm:$0xff]
    %v68 = vld [vmem:[#allocation5 + $0xa0] sm:$0xff]
    %v69 = vld [vmem:[#allocation5 + $0xa8] sm:$0xff]
    %v70 = vld [vmem:[#allocation5 + $0xb0] sm:$0xff]
    %v71 = vld [vmem:[#allocation5 + $0xb8] sm:$0xff]
    %v72 = vld [vmem:[#allocation5 + $0xc0] sm:$0xff]
    %v73 = vld [vmem:[#allocation5 + $0xc8] sm:$0xff]
    %v74 = vld [vmem:[#allocation5 + $0xd0] sm:$0xff]
    %v75 = vld [vmem:[#allocation5 + $0xd8] sm:$0xff]
    %v76 = vld [vmem:[#allocation5 + $0xe0] sm:$0xff]
    %v77 = vld [vmem:[#allocation5 + $0xe8] sm:$0xff]
    %v78 = vld [vmem:[#allocation5 + $0xf0] sm:$0xff]
    %v79 = vld [vmem:[#allocation5 + $0xf8] sm:$0xff]
    %v80 = vld [vmem:[#allocation5 + $0x100] sm:$0xff]
    %v81 = vld [vmem:[#allocation5 + $0x108] sm:$0xff]
    %v82 = vld [vmem:[#allocation5 + $0x110] sm:$0xff]
    %v83 = vld [vmem:[#allocation5 + $0x118] sm:$0xff]
    %v84 = vld [vmem:[#allocation5 + $0x120] sm:$0xff]
    %v85 = vld [vmem:[#allocation5 + $0x128] sm:$0xff]
    %v86 = vld [vmem:[#allocation5 + $0x130] sm:$0xff]
    %v87 = vld [vmem:[#allocation5 + $0x138] sm:$0xff]
    %v88 = vld [vmem:[#allocation5 + $0x140] sm:$0xff]
    %v89 = vld [vmem:[#allocation5 + $0x148] sm:$0xff]
    %v90 = vld [vmem:[#allocation5 + $0x150] sm:$0xff]
    %v91 = vld [vmem:[#allocation5 + $0x158] sm:$0xff]
    %v92 = vld [vmem:[#allocation5 + $0x160] sm:$0xff]
    %v93 = vld [vmem:[#allocation5 + $0x168] sm:$0xff]
    %v94 = vld [vmem:[#allocation5 + $0x170] sm:$0xff]
    %v95 = vld [vmem:[#allocation5 + $0x178] sm:$0xff]
    %v96 = vld [vmem:[#allocation5 + $0x180] sm:$0xff]
    %v97 = vld [vmem:[#allocation5 + $0x188] sm:$0xff]
    %v98 = vld [vmem:[#allocation5 + $0x190] sm:$0xff]
    %v99 = vld [vmem:[#allocation5 + $0x198] sm:$0xff]
    %v100 = vld [vmem:[#allocation5 + $0x1a0] sm:$0xff]
    %v101 = vld [vmem:[#allocation5 + $0x1a8] sm:$0xff]
    %v102 = vld [vmem:[#allocation5 + $0x1b0] sm:$0xff]
    %v103 = vld [vmem:[#allocation5 + $0x1b8] sm:$0xff]
    %v104 = vld [vmem:[#allocation5 + $0x1c0] sm:$0xff]
    %v105 = vld [vmem:[#allocation5 + $0x1c8] sm:$0xff]
    %v106 = vld [vmem:[#allocation5 + $0x1d0] sm:$0xff]
    %v107 = vld [vmem:[#allocation5 + $0x1d8] sm:$0xff]
    %v108 = vld [vmem:[#allocation5 + $0x1e0] sm:$0xff]
    %v109 = vld [vmem:[#allocation5 + $0x1e8] sm:$0xff]
    %v110 = vld [vmem:[#allocation5 + $0x1f0] sm:$0xff]
    %v111 = vld [vmem:[#allocation5 + $0x1f8] sm:$0xff]
    %v112 = vld [vmem:[#allocation5 + $0x200] sm:$0xff]
    %v113 = vld [vmem:[#allocation5 + $0x208] sm:$0xff]
    %v114 = vld [vmem:[#allocation5 + $0x210] sm:$0xff]
    %v115 = vld [vmem:[#allocation5 + $0x218] sm:$0xff]
    %v116 = vld [vmem:[#allocation5 + $0x220] sm:$0xff]
    %v117 = vld [vmem:[#allocation5 + $0x228] sm:$0xff]
    %v118 = vld [vmem:[#allocation5 + $0x230] sm:$0xff]
    %v119 = vld [vmem:[#allocation5 + $0x238] sm:$0xff]
    %v120 = vld [vmem:[#allocation5 + $0x240] sm:$0xff]
    %v121 = vld [vmem:[#allocation5 + $0x248] sm:$0xff]
    %v122 = vld [vmem:[#allocation5 + $0x250] sm:$0xff]
    %v123 = vld [vmem:[#allocation5 + $0x258] sm:$0xff]
    %v124 = vld [vmem:[#allocation5 + $0x260] sm:$0xff]
    %v125 = vld [vmem:[#allocation5 + $0x268] sm:$0xff]
    %v126 = vld [vmem:[#allocation5 + $0x270] sm:$0xff]
    %v127 = vld [vmem:[#allocation5 + $0x278] sm:$0xff]
    %v128 = vld [vmem:[#allocation5 + $0x280] sm:$0xff]
    %v129 = vld [vmem:[#allocation5 + $0x288] sm:$0xff]
    %v130 = vld [vmem:[#allocation5 + $0x290] sm:$0xff]
    %v131 = vld [vmem:[#allocation5 + $0x298] sm:$0xff]
    %v132 = vld [vmem:[#allocation5 + $0x2a0] sm:$0xff]
    %v133 = vld [vmem:[#allocation5 + $0x2a8] sm:$0xff]
    %v134 = vld [vmem:[#allocation5 + $0x2b0] sm:$0xff]
    %v135 = vld [vmem:[#allocation5 + $0x2b8] sm:$0xff]
    %v136 = vld [vmem:[#allocation5 + $0x2c0] sm:$0xff]
    %v137 = vld [vmem:[#allocation5 + $0x2c8] sm:$0xff]
    %v138 = vld [vmem:[#allocation5 + $0x2d0] sm:$0xff]
    %v139 = vld [vmem:[#allocation5 + $0x2d8] sm:$0xff]
    %v140 = vld [vmem:[#allocation5 + $0x2e0] sm:$0xff]
    %v141 = vld [vmem:[#allocation5 + $0x2e8] sm:$0xff]
    %v142 = vld [vmem:[#allocation5 + $0x2f0] sm:$0xff]
    %v143 = vld [vmem:[#allocation5 + $0x2f8] sm:$0xff]
    %v144 = vld [vmem:[#allocation5 + $0x300] sm:$0xff]
    %v145 = vld [vmem:[#allocation5 + $0x308] sm:$0xff]
    %v146 = vld [vmem:[%s2] sm:$0x1]
    %v148 = vlaneseq
    %v149 = vshrl.u32 %v148, 7
    %v150 = vsub.s32 0, %v149
    %v151 = vrot.slane %v146, %v150
    %vm153 = vcmask 130048
    %v155 = vsel %vm153, %v47, 0
    %157 = vmatprep.subr.mxu0 0.0
    %158 = vmatpush1.msra.mxu0 %v63
    %159 = vmatprep.subr.mxu0 0.0
    %160 = vmatpush1.msra.mxu0 %v62
    %161 = vmatprep.subr.mxu0 0.0
    %162 = vmatpush1.msra.mxu0 %v61
    %163 = vmatprep.subr.mxu0 0.0
    %164 = vmatpush1.msra.mxu0 %v60
    %165 = vmatprep.subr.mxu0 0.0
    %166 = vmatpush1.msra.mxu0 %v59
    %167 = vmatprep.subr.mxu0 0.0
    %168 = vmatpush1.msra.mxu0 %v58
    %169 = vmatprep.subr.mxu0 0.0
    %170 = vmatpush1.msra.mxu0 %v57
    %171 = vmatprep.subr.mxu0 0.0
    %172 = vmatpush1.msra.mxu0 %v56
    %173 = vmatprep.subr.mxu0 0.0
    %174 = vmatpush1.msra.mxu0 %v55
    %175 = vmatprep.subr.mxu0 0.0
    %176 = vmatpush1.msra.mxu0 %v54
    %177 = vmatprep.subr.mxu0 0.0
    %178 = vmatpush1.msra.mxu0 %v53
    %179 = vmatprep.subr.mxu0 0.0
    %180 = vmatpush1.msra.mxu0 %v52
    %181 = vmatprep.subr.mxu0 0.0
    %182 = vmatpush1.msra.mxu0 %v51
    %183 = vmatprep.subr.mxu0 0.0
    %184 = vmatpush1.msra.mxu0 %v50
    %185 = vmatprep.subr.mxu0 0.0
    %186 = vmatpush1.msra.mxu0 %v49
    %187 = vmatprep.subr.mxu0 0.0
    %188 = vmatpush1.msra.mxu0 %v48
    %189 = vmatprep.subr.mxu0 0.0
    %190 = vmatpush2.msra.mxu0 %v79
    %191 = vmatprep.subr.mxu0 0.0
    %192 = vmatpush2.msra.mxu0 %v78
    %193 = vmatprep.subr.mxu0 0.0
    %194 = vmatpush2.msra.mxu0 %v77
    %195 = vmatprep.subr.mxu0 0.0
    %196 = vmatpush2.msra.mxu0 %v76
    %197 = vmatprep.subr.mxu0 0.0
    %198 = vmatpush2.msra.mxu0 %v75
    %199 = vmatprep.subr.mxu0 0.0
    %200 = vmatpush2.msra.mxu0 %v74
    %201 = vmatprep.subr.mxu0 0.0
    %202 = vmatpush2.msra.mxu0 %v73
    %203 = vmatprep.subr.mxu0 0.0
    %204 = vmatpush2.msra.mxu0 %v72
    %205 = vmatprep.subr.mxu0 0.0
    %206 = vmatpush2.msra.mxu0 %v71
    %207 = vmatprep.subr.mxu0 0.0
    %208 = vmatpush2.msra.mxu0 %v70
    %209 = vmatprep.subr.mxu0 0.0
    %210 = vmatpush2.msra.mxu0 %v69
    %211 = vmatprep.subr.mxu0 0.0
    %212 = vmatpush2.msra.mxu0 %v68
    %213 = vmatprep.subr.mxu0 0.0
    %214 = vmatpush2.msra.mxu0 %v67
    %215 = vmatprep.subr.mxu0 0.0
    %216 = vmatpush2.msra.mxu0 %v66
    %217 = vmatprep.subr.mxu0 0.0
    %218 = vmatpush2.msra.mxu0 %v65
    %219 = vmatprep.subr.mxu0 0.0
    %220 = vmatpush2.msra.mxu0 %v64
    %221 = vmatprep.mubr.f32.mxu0 %v42
    %222 = vmatmul.mubr.f32.gmra.mxu0 %v41
    %v223 = vpop.f32.mrf.mxu0
    %v224 = vadd.f32 %v151, %v223
    %v225 = vpop.f32.mrf.mxu0
    %226 = vdwg.mxu0
    %227 = vmatprep.subr.mxu0 0.0
    %228 = vmatpush1.msra.mxu0 %v95
    %229 = vmatprep.subr.mxu0 0.0
    %230 = vmatpush1.msra.mxu0 %v94
    %231 = vmatprep.subr.mxu0 0.0
    %232 = vmatpush1.msra.mxu0 %v93
    %233 = vmatprep.subr.mxu0 0.0
    %234 = vmatpush1.msra.mxu0 %v92
    %235 = vmatprep.subr.mxu0 0.0
    %236 = vmatpush1.msra.mxu0 %v91
    %237 = vmatprep.subr.mxu0 0.0
    %238 = vmatpush1.msra.mxu0 %v90
    %239 = vmatprep.subr.mxu0 0.0
    %240 = vmatpush1.msra.mxu0 %v89
    %241 = vmatprep.subr.mxu0 0.0
    %242 = vmatpush1.msra.mxu0 %v88
    %243 = vmatprep.subr.mxu0 0.0
    %244 = vmatpush1.msra.mxu0 %v87
    %245 = vmatprep.subr.mxu0 0.0
    %246 = vmatpush1.msra.mxu0 %v86
    %247 = vmatprep.subr.mxu0 0.0
    %248 = vmatpush1.msra.mxu0 %v85
    %249 = vmatprep.subr.mxu0 0.0
    %250 = vmatpush1.msra.mxu0 %v84
    %251 = vmatprep.subr.mxu0 0.0
    %252 = vmatpush1.msra.mxu0 %v83
    %253 = vmatprep.subr.mxu0 0.0
    %254 = vmatpush1.msra.mxu0 %v82
    %255 = vmatprep.subr.mxu0 0.0
    %256 = vmatpush1.msra.mxu0 %v81
    %257 = vmatprep.subr.mxu0 0.0
    %258 = vmatpush1.msra.mxu0 %v80
    %259 = vmatprep.subr.mxu0 0.0
    %260 = vmatpush2.msra.mxu0 %v111
    %261 = vmatprep.subr.mxu0 0.0
    %262 = vmatpush2.msra.mxu0 %v110
    %263 = vmatprep.subr.mxu0 0.0
    %264 = vmatpush2.msra.mxu0 %v109
    %265 = vmatprep.subr.mxu0 0.0
    %266 = vmatpush2.msra.mxu0 %v108
    %267 = vmatprep.subr.mxu0 0.0
    %268 = vmatpush2.msra.mxu0 %v107
    %269 = vmatprep.subr.mxu0 0.0
    %270 = vmatpush2.msra.mxu0 %v106
    %271 = vmatprep.subr.mxu0 0.0
    %272 = vmatpush2.msra.mxu0 %v105
    %273 = vmatprep.subr.mxu0 0.0
    %274 = vmatpush2.msra.mxu0 %v104
    %275 = vmatprep.subr.mxu0 0.0
    %276 = vmatpush2.msra.mxu0 %v103
    %277 = vmatprep.subr.mxu0 0.0
    %278 = vmatpush2.msra.mxu0 %v102
    %279 = vmatprep.subr.mxu0 0.0
    %280 = vmatpush2.msra.mxu0 %v101
    %281 = vmatprep.subr.mxu0 0.0
    %282 = vmatpush2.msra.mxu0 %v100
    %283 = vmatprep.subr.mxu0 0.0
    %284 = vmatpush2.msra.mxu0 %v99
    %285 = vmatprep.subr.mxu0 0.0
    %286 = vmatpush2.msra.mxu0 %v98
    %287 = vmatprep.subr.mxu0 0.0
    %288 = vmatpush2.msra.mxu0 %v97
    %289 = vmatprep.subr.mxu0 0.0
    %290 = vmatpush2.msra.mxu0 %v96
    %291 = vmatprep.mubr.f32.mxu0 %v44
    %292 = vmatmul.mubr.f32.gmra.mxu0 %v43
    %v293 = vpop.f32.mrf.mxu0
    %v294 = vadd.f32 %v224, %v293
    %v295 = vpop.f32.mrf.mxu0
    %296 = vdwg.mxu0
    %297 = vmatprep.subr.mxu0 0.0
    %298 = vmatpush1.msra.mxu0 %v127
    %299 = vmatprep.subr.mxu0 0.0
    %300 = vmatpush1.msra.mxu0 %v126
    %301 = vmatprep.subr.mxu0 0.0
    %302 = vmatpush1.msra.mxu0 %v125
    %303 = vmatprep.subr.mxu0 0.0
    %304 = vmatpush1.msra.mxu0 %v124
    %305 = vmatprep.subr.mxu0 0.0
    %306 = vmatpush1.msra.mxu0 %v123
    %307 = vmatprep.subr.mxu0 0.0
    %308 = vmatpush1.msra.mxu0 %v122
    %309 = vmatprep.subr.mxu0 0.0
    %310 = vmatpush1.msra.mxu0 %v121
    %311 = vmatprep.subr.mxu0 0.0
    %312 = vmatpush1.msra.mxu0 %v120
    %313 = vmatprep.subr.mxu0 0.0
    %314 = vmatpush1.msra.mxu0 %v119
    %315 = vmatprep.subr.mxu0 0.0
    %316 = vmatpush1.msra.mxu0 %v118
    %317 = vmatprep.subr.mxu0 0.0
    %318 = vmatpush1.msra.mxu0 %v117
    %319 = vmatprep.subr.mxu0 0.0
    %320 = vmatpush1.msra.mxu0 %v116
    %321 = vmatprep.subr.mxu0 0.0
    %322 = vmatpush1.msra.mxu0 %v115
    %323 = vmatprep.subr.mxu0 0.0
    %324 = vmatpush1.msra.mxu0 %v114
    %325 = vmatprep.subr.mxu0 0.0
    %326 = vmatpush1.msra.mxu0 %v113
    %327 = vmatprep.subr.mxu0 0.0
    %328 = vmatpush1.msra.mxu0 %v112
    %329 = vmatprep.subr.mxu0 0.0
    %330 = vmatpush2.msra.mxu0 %v143
    %331 = vmatprep.subr.mxu0 0.0
    %332 = vmatpush2.msra.mxu0 %v142
    %333 = vmatprep.subr.mxu0 0.0
    %334 = vmatpush2.msra.mxu0 %v141
    %335 = vmatprep.subr.mxu0 0.0
    %336 = vmatpush2.msra.mxu0 %v140
    %337 = vmatprep.subr.mxu0 0.0
    %338 = vmatpush2.msra.mxu0 %v139
    %339 = vmatprep.subr.mxu0 0.0
    %340 = vmatpush2.msra.mxu0 %v138
    %341 = vmatprep.subr.mxu0 0.0
    %342 = vmatpush2.msra.mxu0 %v137
    %343 = vmatprep.subr.mxu0 0.0
    %344 = vmatpush2.msra.mxu0 %v136
    %345 = vmatprep.subr.mxu0 0.0
    %346 = vmatpush2.msra.mxu0 %v135
    %347 = vmatprep.subr.mxu0 0.0
    %348 = vmatpush2.msra.mxu0 %v134
    %349 = vmatprep.subr.mxu0 0.0
    %350 = vmatpush2.msra.mxu0 %v133
    %351 = vmatprep.subr.mxu0 0.0
    %352 = vmatpush2.msra.mxu0 %v132
    %353 = vmatprep.subr.mxu0 0.0
    %354 = vmatpush2.msra.mxu0 %v131
    %355 = vmatprep.subr.mxu0 0.0
    %356 = vmatpush2.msra.mxu0 %v130
    %357 = vmatprep.subr.mxu0 0.0
    %358 = vmatpush2.msra.mxu0 %v129
    %359 = vmatprep.subr.mxu0 0.0
    %360 = vmatpush2.msra.mxu0 %v128
    %361 = vmatprep.mubr.f32.mxu0 %v46
    %362 = vmatmul.mubr.f32.gmra.mxu0 %v45
    %v363 = vpop.f32.mrf.mxu0
    %v364 = vadd.f32 %v294, %v363
    %v365 = vpop.f32.mrf.mxu0
    %366 = vdwg.mxu0
    %367 = vmatprep.subr.mxu0 0.0
    %368 = vmatpush1.msra.mxu0 0.0
    %369 = vmatprep.subr.mxu0 0.0
    %370 = vmatpush1.msra.mxu0 0.0
    %371 = vmatprep.subr.mxu0 0.0
    %372 = vmatpush1.msra.mxu0 0.0
    %373 = vmatprep.subr.mxu0 0.0
    %374 = vmatpush1.msra.mxu0 0.0
    %375 = vmatprep.subr.mxu0 0.0
    %376 = vmatpush1.msra.mxu0 0.0
    %377 = vmatprep.subr.mxu0 0.0
    %378 = vmatpush1.msra.mxu0 0.0
    %379 = vmatprep.subr.mxu0 0.0
    %380 = vmatpush1.msra.mxu0 0.0
    %381 = vmatprep.subr.mxu0 0.0
    %382 = vmatpush1.msra.mxu0 0.0
    %383 = vmatprep.subr.mxu0 0.0
    %384 = vmatpush1.msra.mxu0 0.0
    %385 = vmatprep.subr.mxu0 0.0
    %386 = vmatpush1.msra.mxu0 0.0
    %387 = vmatprep.subr.mxu0 0.0
    %388 = vmatpush1.msra.mxu0 0.0
    %389 = vmatprep.subr.mxu0 0.0
    %390 = vmatpush1.msra.mxu0 0.0
    %391 = vmatprep.subr.mxu0 0.0
    %392 = vmatpush1.msra.mxu0 0.0
    %393 = vmatprep.subr.mxu0 0.0
    %394 = vmatpush1.msra.mxu0 0.0
    %395 = vmatprep.subr.mxu0 0.0
    %396 = vmatpush1.msra.mxu0 %v145
    %397 = vmatprep.subr.mxu0 0.0
    %398 = vmatpush1.msra.mxu0 %v144
    %399 = vmatprep.subr.mxu0 0.0
    %400 = vmatpush2.msra.mxu0 0.0
    %401 = vmatprep.subr.mxu0 0.0
    %402 = vmatpush2.msra.mxu0 0.0
    %403 = vmatprep.subr.mxu0 0.0
    %404 = vmatpush2.msra.mxu0 0.0
    %405 = vmatprep.subr.mxu0 0.0
    %406 = vmatpush2.msra.mxu0 0.0
    %407 = vmatprep.subr.mxu0 0.0
    %408 = vmatpush2.msra.mxu0 0.0
    %409 = vmatprep.subr.mxu0 0.0
    %410 = vmatpush2.msra.mxu0 0.0
    %411 = vmatprep.subr.mxu0 0.0
    %412 = vmatpush2.msra.mxu0 0.0
    %413 = vmatprep.subr.mxu0 0.0
    %414 = vmatpush2.msra.mxu0 0.0
    %415 = vmatprep.subr.mxu0 0.0
    %416 = vmatpush2.msra.mxu0 0.0
    %417 = vmatprep.subr.mxu0 0.0
    %418 = vmatpush2.msra.mxu0 0.0
    %419 = vmatprep.subr.mxu0 0.0
    %420 = vmatpush2.msra.mxu0 0.0
    %421 = vmatprep.subr.mxu0 0.0
    %422 = vmatpush2.msra.mxu0 0.0
    %423 = vmatprep.subr.mxu0 0.0
    %424 = vmatpush2.msra.mxu0 0.0
    %425 = vmatprep.subr.mxu0 0.0
    %426 = vmatpush2.msra.mxu0 0.0
    %427 = vmatprep.subr.mxu0 0.0
    %428 = vmatpush2.msra.mxu0 0.0
    %429 = vmatprep.subr.mxu0 0.0
    %430 = vmatpush2.msra.mxu0 0.0
    %431 = vmatprep.mubr.f32.mxu0 0.0
    %432 = vmatmul.mubr.f32.gmra.mxu0 %v155
    %v433 = vpop.f32.mrf.mxu0
    %v434 = vadd.f32 %v364, %v433
    %v435 = vpop.f32.mrf.mxu0
    %436 = vdwg.mxu0
    %v437 = vlaneseq
    %v438 = vand.u32 %v437, 127
    %vm439 = vcmp.lt.s32.totalorder %v438, 10
    %vm440 = vcmp.gt.f32.partialorder %v434, 0.0
    %v441 = vmin.f32 %v434, 0.0
    %v442 = vmul.f32 %v441, 1.442695
    %v443 = vpow.pop %v442
    %v444 = vsub.f32 %v443, 1.0
    %v445 = vsel %vm440, %v434, %v444
    %v446 = vsel %vm439, %v445, -inf
    %447 = vmax.xlane.f32.xlu0 %v446
    %v448 = vpop.xlane.xlu0 %447
    %v449 = vsub.f32 %v446, %v448
    %v450 = vmul.f32 %v449, 1.442695
    %v451 = vpow.pop %v450
    %452 = vadd.xlane.f32.xlu0 %v451
    %v453 = vpop.xlane.xlu0 %452
    %v454 = vlog2.pop %v453
    %v455 = vmul.f32 %v454, 0.6931472
    %v456 = vsub.f32 %v449, %v455
    %vm457 = vcmask 80896
    %458 = vst.msk [vmem:[#allocation7] sm:$0xff] %vm457, %v456
    // Predicated region
    $region22: #{tpu_custom_call.1} parent=1 // pred_check
      _
    $region23: #{tpu_custom_call.1} parent=1 // pred_check_branch
      %460 = sbr.rel (0) target = $region25
    $region24: #{tpu_custom_call.1} parent=1 // pred_region
      %s462 = ssub.s32 128, 128
      %463 = vsyncadd [#allocation4], %s462
      %s465 = sshll.u32 [#allocation7], 4
      %s466 = int_to_ptr.vmem [resolvable:$true] %s465
      %468 = dma.vmem_to_hbm [thread:$0]  %s466, 128, %s3, [#allocation4]
    $region25: #{tpu_custom_call.1} parent=1 // pred_fallthru
      _
    // Predicated region
    $region26: #{tpu_custom_call.1} parent=1 // pred_check
      _
    $region27: #{tpu_custom_call.1} parent=1 // pred_check_branch
      %470 = sbr.rel (0) target = $region29
    $region28: #{tpu_custom_call.1} parent=1 // pred_region
      %471 = dma.done [#allocation4], 128
    $region29: #{tpu_custom_call.1} parent=1 // pred_fallthru
      _
    %472 = vsyncpa [#allocation3], 1
    %473 = vsyncpa [#allocation6], 1
    %474 = vsyncpa [#allocation4], 1

</llo_original>
